<compile_context>
chip_gen: v7x
topology: tpu7x:2x2x1
jax: 0.10.0
libtpu: 0.0.40
codegen_flags: <defaults>
</compile_context>

<pallas_src>
import functools
import numpy as np

import jax
import jax.numpy as jnp
from jax.experimental import pallas as pl
from jax.experimental.pallas import tpu as pltpu


# ----------------------------------------------------------------------------
# Scaled-down spatial constants (channels are exact, see header comment).
IMAGE_SIZE = 48          # original: 475
PYRAMID_SIZE = 6         # original: 60
POOL_SIZES = [6, 3, 2, 1]
CLASS_NUM = 21

ACT_DTYPE = jnp.bfloat16   # inter-layer activation dtype


def _round_up(x, m):
    return (x + m - 1) // m * m


def _compute_vmem_limit():
    """Scoped VMEM limit derived from the actual chip (safe on v5e/v6e/v7x)."""
    cap = 64 * 1024 * 1024
    try:
        cap = int(pltpu.get_tpu_info().vmem_capacity_bytes)
    except Exception:
        pass
    return int(min(cap * 3 // 4, 96 * 1024 * 1024))


_VMEM_LIMIT = _compute_vmem_limit()


def _pad_k(K):
    Kp = _round_up(K, 128)
    if Kp > 2048:
        Kp = _round_up(K, 2048)
    return Kp


def _pick_tn(Np, prefer_multi=False):
    """Pick an N tile (multiple of 128).  If prefer_multi, try to expose at
    least two parallel N blocks (keeps v7x's 2nd TensorCore busy)."""
    cands = [c for c in (512, 256, 128) if Np % c == 0]
    if not cands:
        return Np
    tn = cands[0]
    if prefer_multi and Np // tn < 2:
        for c in cands[1:]:
            if Np // c >= 2:
                return c
    return tn


# ----------------------------------------------------------------------------
# Pallas kernels
# ----------------------------------------------------------------------------
def _matmul_affine_kernel(a_ref, w_ref, s_ref, b_ref, o_ref, acc_ref, *, relu):
    """Tiled bf16 matmul, f32 accumulation, fused scale/bias (+ optional ReLU)."""
    @pl.when(pl.program_id(2) == 0)
    def _():
        acc_ref[...] = jnp.zeros_like(acc_ref)

    acc_ref[...] += jnp.dot(a_ref[...], w_ref[...],
                            preferred_element_type=jnp.float32)

    @pl.when(pl.program_id(2) == pl.num_programs(2) - 1)
    def _():
        y = acc_ref[...] * s_ref[...] + b_ref[...]
        if relu:
            y = jnp.maximum(y, 0.0)
        o_ref[...] = y.astype(o_ref.dtype)


def _conv3x3_kernel(x_ref, w_ref, s_ref, b_ref, o_ref, acc_ref, *,
                    Ho, Wo_pad, d, relu):
    """Fused 3x3 stride-1 'same' conv: 9 shifted matmuls over a VMEM-resident
    padded NHWC activation block.  Grid = (N blocks, Cin chunks)."""
    @pl.when(pl.program_id(1) == 0)
    def _():
        acc_ref[...] = jnp.zeros_like(acc_ref)

    B = x_ref.shape[0]
    tc = x_ref.shape[3]
    for kk in range(9):
        dy, dx = kk // 3, kk % 3
        xs = x_ref[:, dy * d: dy * d + Ho, dx * d: dx * d + Wo_pad, :]
        a = xs.reshape(B * Ho * Wo_pad, tc)
        acc_ref[...] += jnp.dot(a, w_ref[kk],
                                preferred_element_type=jnp.float32)

    @pl.when(pl.program_id(1) == pl.num_programs(1) - 1)
    def _():
        y = acc_ref[...] * s_ref[...] + b_ref[...]
        if relu:
            y = jnp.maximum(y, 0.0)
        o_ref[...] = y.astype(o_ref.dtype)


def _window_reduce_kernel(x_ref, o_ref, *, op):
    """Reduce the window axis (axis=1) of an (M, P, C) block (max or mean)."""
    x = x_ref[...].astype(jnp.float32)
    if op == "max":
        r = jnp.max(x, axis=1)
    else:  # mean
        r = jnp.sum(x, axis=1) * (1.0 / x_ref.shape[1])
    o_ref[...] = r.astype(o_ref.dtype)


def _add_relu_kernel(x_ref, y_ref, o_ref):
    r = x_ref[...] + y_ref[...]
    o_ref[...] = jnp.maximum(r, jnp.zeros_like(r))


def _bilinear_kernel(idx_ref, x0_ref, x1_ref, o_ref, *, xlo, xhi, xw):
    """One output image row per grid step.  Height interpolation of the two
    prefetch-gathered source rows + statically unrolled width interpolation.
    idx_ref[i] = (y_lo, y_hi, round(w_y * 2^24))."""
    i = pl.program_id(0)
    wy = idx_ref[i, 2].astype(jnp.float32) * (1.0 / float(1 << 24))
    r0 = x0_ref[...].astype(jnp.float32)
    r1 = x1_ref[...].astype(jnp.float32)
    row = r0 * (1.0 - wy) + r1 * wy                    # (B, 1, W, C)
    for j in range(len(xlo)):
        v = (row[:, :, xlo[j], :] * (1.0 - xw[j])
             + row[:, :, xhi[j], :] * xw[j])
        o_ref[:, :, j, :] = v.astype(o_ref.dtype)


# ----------------------------------------------------------------------------
# Pallas wrappers
# ----------------------------------------------------------------------------
def pallas_matmul_affine(a, w_p, s_p, b_p, relu, n_out, out_dtype=ACT_DTYPE):
    """a: (M, K); w_p: (Kp, Np) bf16 pre-padded; s_p/b_p: (1, Np) f32.
    Returns (M, n_out) in out_dtype."""
    M, K = a.shape
    Kp, Np = w_p.shape
    a = a.astype(jnp.bfloat16)
    if Kp != K:
        a = jnp.pad(a, ((0, 0), (0, Kp - K)))

    tk = min(Kp, 2048)
    tm = _round_up(max(M, 8), 8) if M <= 512 else 256
    Mp = _round_up(M, tm)
    tn = _pick_tn(Np, prefer_multi=(Mp // tm == 1))
    if Mp != M:
        a = jnp.pad(a, ((0, Mp - M), (0, 0)))

    grid = (Mp // tm, Np // tn, Kp // tk)
    flops = 2 * Mp * Kp * Np
    bytes_accessed = int(a.size * 2 + w_p.size * 2 + Mp * Np * 2 + 2 * Np * 4)

    out = pl.pallas_call(
        functools.partial(_matmul_affine_kernel, relu=relu),
        out_shape=jax.ShapeDtypeStruct((Mp, Np), out_dtype),
        grid_spec=pltpu.PrefetchScalarGridSpec(
            num_scalar_prefetch=0,
            grid=grid,
            in_specs=[
                pl.BlockSpec((tm, tk), lambda i, j, k: (i, k)),
                pl.BlockSpec((tk, tn), lambda i, j, k: (k, j)),
                pl.BlockSpec((1, tn), lambda i, j, k: (0, j)),
                pl.BlockSpec((1, tn), lambda i, j, k: (0, j)),
            ],
            out_specs=pl.BlockSpec((tm, tn), lambda i, j, k: (i, j)),
            scratch_shapes=[pltpu.VMEM((tm, tn), jnp.float32)],
        ),
        compiler_params=pltpu.CompilerParams(
            dimension_semantics=("parallel", "parallel", "arbitrary"),
            vmem_limit_bytes=_VMEM_LIMIT,
        ),
        cost_estimate=pl.CostEstimate(flops=flops, transcendentals=0,
                                      bytes_accessed=bytes_accessed),
    )(a, w_p, s_p, b_p)
    if Mp != M or Np != n_out:
        out = out[:M, :n_out]
    return out


def _try_fused_conv3x3(x, prm, dilation, relu):
    """Fused 3x3 stride-1 conv (+BN affine +ReLU).  Returns None when the
    configuration is unsupported / too large (caller falls back to im2col)."""
    if prm["k"] != 3 or prm["pad"] != dilation or "w_k3" not in prm:
        return None
    B, H, W, Cin = x.shape
    d = dilation
    Cout = prm["cout"]
    Np = prm["w_k3"].shape[-1]

    # Cin chunking (only needed for very wide inputs, e.g. the decoder 4096).
    if Cin <= 1024:
        tc = Cin
    elif Cin % 1024 == 0:
        tc = 1024
    elif Cin % 512 == 0:
        tc = 512
    else:
        return None

    Wo_pad = _round_up(W, 8)            # keep the in-kernel reshape tile-aligned
    Hp = H + 2 * d
    Wp = 2 * d + Wo_pad
    Mp = B * H * Wo_pad
    tn = _pick_tn(Np, prefer_multi=True)

    est = (2 * B * Hp * Wp * tc * 2 + 2 * 9 * tc * tn * 2
           + Mp * tn * 4 + 2 * Mp * tn * 2 + 4 * tn * 4)
    if est > _VMEM_LIMIT * 7 // 10:
        return None

    xp = jnp.pad(x.astype(jnp.bfloat16),
                 ((0, 0), (d, d), (d, Wp - W - d), (0, 0)))

    grid = (Np // tn, Cin // tc)
    flops = 2 * Mp * 9 * Cin * Np
    bytes_accessed = int(xp.size * 2 + prm["w_k3"].size * 2 + Mp * Np * 2)
    try:
        out = pl.pallas_call(
            functools.partial(_conv3x3_kernel, Ho=H, Wo_pad=Wo_pad, d=d,
                              relu=relu),
            out_shape=jax.ShapeDtypeStruct((Mp, Np), ACT_DTYPE),
            grid_spec=pltpu.PrefetchScalarGridSpec(
                num_scalar_prefetch=0,
                grid=grid,
                in_specs=[
                    pl.BlockSpec((B, Hp, Wp, tc), lambda j, c: (0, 0, 0, c)),
                    pl.BlockSpec((9, tc, tn), lambda j, c: (0, c, j)),
                    pl.BlockSpec((1, tn), lambda j, c: (0, j)),
                    pl.BlockSpec((1, tn), lambda j, c: (0, j)),
                ],
                out_specs=pl.BlockSpec((Mp, tn), lambda j, c: (0, j)),
                scratch_shapes=[pltpu.VMEM((Mp, tn), jnp.float32)],
            ),
            compiler_params=pltpu.CompilerParams(
                dimension_semantics=("parallel", "arbitrary"),
                vmem_limit_bytes=_VMEM_LIMIT,
            ),
            cost_estimate=pl.CostEstimate(flops=flops, transcendentals=0,
                                          bytes_accessed=bytes_accessed),
        )(xp, prm["w_k3"], prm["scale"], prm["bias"])
    except Exception:
        return None
    return out.reshape(B, H, Wo_pad, Np)[:, :, :W, :Cout]


def pallas_window_reduce(x, op):
    """x: (M, P, C) -> (M, C), reducing axis 1 with max or mean.  Tiled."""
    M, P, C = x.shape
    tc = C if C <= 512 else (512 if C % 512 == 0 else C)
    tm = _round_up(max(M, 8), 8) if M <= 1024 else 512
    Mp = _round_up(M, tm)
    if Mp != M:
        x = jnp.pad(x, ((0, Mp - M), (0, 0), (0, 0)))
    grid = (Mp // tm, C // tc)
    out = pl.pallas_call(
        functools.partial(_window_reduce_kernel, op=op),
        out_shape=jax.ShapeDtypeStruct((Mp, C), x.dtype),
        grid_spec=pltpu.PrefetchScalarGridSpec(
            num_scalar_prefetch=0,
            grid=grid,
            in_specs=[pl.BlockSpec((tm, P, tc), lambda i, j: (i, 0, j))],
            out_specs=pl.BlockSpec((tm, tc), lambda i, j: (i, j)),
        ),
        compiler_params=pltpu.CompilerParams(
            dimension_semantics=("parallel", "parallel"),
            vmem_limit_bytes=_VMEM_LIMIT,
        ),
    )(x)
    return out[:M] if Mp != M else out


def pallas_add_relu(x, y):
    """Residual add + ReLU on NHWC tensors, tiled over rows / channels."""
    B, H, W, C = x.shape
    M = B * H * W
    tc = C if C <= 1024 else (1024 if C % 1024 == 0 else C)
    tm = _round_up(max(M, 8), 8) if M <= 1024 else 512
    Mp = _round_up(M, tm)
    xr, yr = x.reshape(M, C), y.reshape(M, C)
    if Mp != M:
        xr = jnp.pad(xr, ((0, Mp - M), (0, 0)))
        yr = jnp.pad(yr, ((0, Mp - M), (0, 0)))
    grid = (Mp // tm, C // tc)
    out = pl.pallas_call(
        _add_relu_kernel,
        out_shape=jax.ShapeDtypeStruct((Mp, C), x.dtype),
        grid_spec=pltpu.PrefetchScalarGridSpec(
            num_scalar_prefetch=0,
            grid=grid,
            in_specs=[pl.BlockSpec((tm, tc), lambda i, j: (i, j)),
                      pl.BlockSpec((tm, tc), lambda i, j: (i, j))],
            out_specs=pl.BlockSpec((tm, tc), lambda i, j: (i, j)),
        ),
        compiler_params=pltpu.CompilerParams(
            dimension_semantics=("parallel", "parallel"),
            vmem_limit_bytes=_VMEM_LIMIT,
        ),
    )(xr, yr)
    out = out[:M] if Mp != M else out
    return out.reshape(B, H, W, C)


def _bilinear_tables(in_size, out_size):
    lo = np.zeros((out_size,), np.int32)
    hi = np.zeros((out_size,), np.int32)
    w = np.zeros((out_size,), np.float32)
    for i in range(out_size):
        if in_size == 1 or out_size == 1:
            src = 0.0
        else:
            src = i * (in_size - 1) / (out_size - 1)
        l = min(int(np.floor(src)), in_size - 1)
        h = min(l + 1, in_size - 1)
        lo[i], hi[i], w[i] = l, h, src - l
    return lo, hi, w


def bilinear_upsample(x, out_h, out_w):
    """F.interpolate(mode='bilinear', align_corners=True) as a lane-dense
    VPU Pallas kernel (one output row per grid step)."""
    B, H, W, C = x.shape
    if out_h == H and out_w == W:
        return x
    ylo, yhi, yw = _bilinear_tables(H, out_h)
    xlo, xhi, xw = _bilinear_tables(W, out_w)
    idx = np.stack([ylo, yhi, np.round(yw * (1 << 24)).astype(np.int32)],
                   axis=1)
    idx = jnp.asarray(idx, jnp.int32)                      # (out_h, 3)
    try:
        return pl.pallas_call(
            functools.partial(_bilinear_kernel,
                              xlo=[int(v) for v in xlo],
                              xhi=[int(v) for v in xhi],
                              xw=[float(v) for v in xw]),
            out_shape=jax.ShapeDtypeStruct((B, out_h, out_w, C), x.dtype),
            grid_spec=pltpu.PrefetchScalarGridSpec(
                num_scalar_prefetch=1,
                grid=(out_h,),
                in_specs=[
                    pl.BlockSpec((B, 1, W, C),
                                 lambda i, t: (0, t[i, 0], 0, 0)),
                    pl.BlockSpec((B, 1, W, C),
                                 lambda i, t: (0, t[i, 1], 0, 0)),
                ],
                out_specs=pl.BlockSpec((B, 1, out_w, C),
                                       lambda i, t: (0, i, 0, 0)),
            ),
            compiler_params=pltpu.CompilerParams(
                dimension_semantics=("parallel",),
                vmem_limit_bytes=_VMEM_LIMIT,
            ),
        )(idx, x, x)
    except Exception:
        # Safety net: plain-JAX interpolation (should not normally trigger).
        Lh = jnp.zeros((out_h, H), jnp.float32)
        Lh = Lh.at[np.arange(out_h), ylo].add(1.0 - yw)
        Lh = Lh.at[np.arange(out_h), yhi].add(yw)
        Lw = jnp.zeros((out_w, W), jnp.float32)
        Lw = Lw.at[np.arange(out_w), xlo].add(1.0 - xw)
        Lw = Lw.at[np.arange(out_w), xhi].add(xw)
        y = jnp.einsum("oh,bhwc->bowc", Lh, x.astype(jnp.float32))
        y = jnp.einsum("ow,bhwc->bhoc", Lw, y)
        return y.astype(x.dtype)


# ----------------------------------------------------------------------------
# im2col glue (only used for the two stride-2 convolutions / fallback)
# ----------------------------------------------------------------------------
def extract_patches(x, k, stride, dilation, pad, pad_value=0.0):
    """x: (B, H, W, C) NHWC -> patches (B, Ho, Wo, k*k, C)."""
    B, H, W, C = x.shape
    xp = jnp.pad(x, ((0, 0), (pad, pad), (pad, pad), (0, 0)),
                 constant_values=pad_value)
    Hp, Wp = H + 2 * pad, W + 2 * pad
    eff = dilation * (k - 1) + 1
    Ho = (Hp - eff) // stride + 1
    Wo = (Wp - eff) // stride + 1
    cols = []
    for dy in range(k):
        for dx in range(k):
            ys, xs = dy * dilation, dx * dilation
            sl = xp[:, ys: ys + (Ho - 1) * stride + 1: stride,
                       xs: xs + (Wo - 1) * stride + 1: stride, :]
            cols.append(sl)
    patches = jnp.stack(cols, axis=3)           # (B, Ho, Wo, k*k, C)
    return patches, Ho, Wo


def conv_bn_act(x, prm, stride=1, dilation=1, relu=True):
    """Conv2d(+folded BN)(+ReLU)."""
    k, Cout = prm["k"], prm["cout"]
    if k == 1:
        if stride > 1:
            x = x[:, ::stride, ::stride, :]
        B, H, W, C = x.shape
        A = x.reshape(B * H * W, C)
        y = pallas_matmul_affine(A, prm["w_mm"], prm["scale"], prm["bias"],
                                 relu, Cout)
        return y.reshape(B, H, W, Cout)

    if k == 3 and stride == 1:
        y = _try_fused_conv3x3(x, prm, dilation, relu)
        if y is not None:
            return y

    # generic im2col path (stride-2 convs and any unsupported fused config)
    B = x.shape[0]
    patches, Ho, Wo = extract_patches(x, k, stride, dilation, prm["pad"])
    A = patches.reshape(B * Ho * Wo, k * k * x.shape[-1])
    y = pallas_matmul_affine(A, prm["w_mm"], prm["scale"], prm["bias"],
                             relu, Cout)
    return y.reshape(B, Ho, Wo, Cout)


def max_pool_3x3_s2(x):
    patches, Ho, Wo = extract_patches(x, 3, 2, 1, 1, pad_value=-jnp.inf)
    B, C = x.shape[0], x.shape[-1]
    y = pallas_window_reduce(patches.reshape(B * Ho * Wo, 9, C), op="max")
    return y.reshape(B, Ho, Wo, C)


def adaptive_avg_pool(x, p):
    """Adaptive average pool to (p, p); here H, W are multiples of p."""
    B, H, W, C = x.shape
    if H == p and W == p:
        return x
    bh, bw = H // p, W // p
    xr = x.reshape(B, p, bh, p, bw, C).transpose(0, 1, 3, 2, 4, 5)
    xr = xr.reshape(B * p * p, bh * bw, C)
    y = pallas_window_reduce(xr, op="mean")
    return y.reshape(B, p, p, C)


# ----------------------------------------------------------------------------
# Deterministic parameter construction (weights pre-padded / pre-cast once)
# ----------------------------------------------------------------------------
_BASE_KEY = jax.random.PRNGKey(0)
_KEY_CTR = [0]


def _next_key():
    _KEY_CTR[0] += 1
    return jax.random.fold_in(_BASE_KEY, _KEY_CTR[0])


def conv_params(cin, cout, k, pad, with_bn=True, conv_bias=False):
    fan_in = cin * k * k
    w = jax.random.normal(_next_key(), (k * k * cin, cout), jnp.float32)
    w = w * (1.0 / np.sqrt(fan_in))
    if with_bn:
        # inference-mode BN folded to per-channel scale/bias
        scale = 1.0 + 0.1 * jax.random.normal(_next_key(), (cout,), jnp.float32)
        bias = 0.05 * jax.random.normal(_next_key(), (cout,), jnp.float32)
    else:
        scale = jnp.ones((cout,), jnp.float32)
        if conv_bias:
            bias = 0.05 * jax.random.normal(_next_key(), (cout,), jnp.float32)
        else:
            bias = jnp.zeros((cout,), jnp.float32)

    K = k * k * cin
    Kp = _pad_k(K)
    Np = _round_up(cout, 128)
    prm = {
        "k": k, "pad": pad, "cin": cin, "cout": cout,
        "w_mm": jnp.pad(w, ((0, Kp - K), (0, Np - cout))).astype(jnp.bfloat16),
        "scale": jnp.pad(scale.reshape(1, -1), ((0, 0), (0, Np - cout))),
        "bias": jnp.pad(bias.reshape(1, -1), ((0, 0), (0, Np - cout))),
    }
    if k == 3:
        prm["w_k3"] = jnp.pad(
            w.reshape(9, cin, cout),
            ((0, 0), (0, 0), (0, Np - cout))).astype(jnp.bfloat16)
    return prm


def build_pspnet_params(class_num):
    p = {}
    # FeatureMapConvolution
    p["fc1"] = conv_params(3, 64, 3, 1)     # stride 2
    p["fc2"] = conv_params(64, 64, 3, 1)
    p["fc3"] = conv_params(64, 128, 3, 1)
    # ResNet50 (PSP dilated variant): (n_blocks, in, mid, out, stride, dilation)
    cfg = [(3, 128, 64, 256, 1, 1),
           (4, 256, 128, 512, 2, 1),
           (6, 512, 256, 1024, 1, 2),
           (3, 1024, 512, 2048, 1, 4)]
    layers = []
    for (n, cin, mid, cout, stride, dil) in cfg:
        blocks = []
        for b in range(n):
            bin_ = cin if b == 0 else cout
            s = stride if b == 0 else 1
            blk = {"c1": conv_params(bin_, mid, 1, 0),
                   "c2": conv_params(mid, mid, 3, dil),
                   "c3": conv_params(mid, cout, 1, 0),
                   "stride": s, "dil": dil}
            if b == 0:
                blk["down"] = conv_params(bin_, cout, 1, 0)
            blocks.append(blk)
        layers.append(blocks)
    p["resnet"] = layers
    # PyramidPooling: 1x1 conv 2048 -> 512 per pool size
    p["pp"] = [conv_params(2048, 512, 1, 0) for _ in POOL_SIZES]
    # Decoder
    p["dec1"] = conv_params(2048 + 512 * len(POOL_SIZES), 512, 3, 1)
    p["cls"] = conv_params(512, class_num, 1, 0, with_bn=False, conv_bias=True)
    return p


# ----------------------------------------------------------------------------
# PSPNet forward
# ----------------------------------------------------------------------------
def bottleneck(x, blk):
    y = conv_bn_act(x, blk["c1"])
    y = conv_bn_act(y, blk["c2"], stride=blk["stride"], dilation=blk["dil"])
    y = conv_bn_act(y, blk["c3"], relu=False)
    if "down" in blk:
        skip = conv_bn_act(x, blk["down"], stride=blk["stride"], relu=False)
    else:
        skip = x
    return pallas_add_relu(y, skip)


def pyramid_pooling(x, pp_params):
    H, W = x.shape[1], x.shape[2]
    outs = [x]
    for prm, psize in zip(pp_params, POOL_SIZES):
        y = adaptive_avg_pool(x, psize)
        y = conv_bn_act(y, prm)
        y = bilinear_upsample(y, H, W)
        outs.append(y)
    return jnp.concatenate(outs, axis=-1)


def decoder(x, params):
    y = conv_bn_act(x, params["dec1"])
    # Dropout2d(p=0.1): identity in eval mode.
    y = conv_bn_act(y, params["cls"], relu=False)
    y = bilinear_upsample(y, IMAGE_SIZE, IMAGE_SIZE)
    return y


def pspnet_forward(params, x_nchw):
    # NCHW -> NHWC, bf16 activations
    x = jnp.transpose(x_nchw, (0, 2, 3, 1)).astype(ACT_DTYPE)

    # FeatureMapConvolution
    y = conv_bn_act(x, params["fc1"], stride=2)
    y = conv_bn_act(y, params["fc2"])
    y = conv_bn_act(y, params["fc3"])
    y = max_pool_3x3_s2(y)

    # ResNet50 (dilated PSP variant)
    for blocks in params["resnet"]:
        for blk in blocks:
            y = bottleneck(y, blk)

    # PyramidPooling (in_channels=2048, pool_sizes=[6,3,2,1])
    y = pyramid_pooling(y, params["pp"])

    # Decoder -> (B, IMAGE_SIZE, IMAGE_SIZE, class_num)
    y = decoder(y, params)

    # NHWC -> NCHW (PyTorch output layout), f32 at the boundary
    return jnp.transpose(y, (0, 3, 1, 2)).astype(jnp.float32)


# ----------------------------------------------------------------------------
if __name__ == "__main__":
    params = build_pspnet_params(CLASS_NUM)
    x = jax.random.normal(jax.random.PRNGKey(0),
                          (2, 3, IMAGE_SIZE, IMAGE_SIZE), jnp.float32)

    out = pspnet_forward(params, x)
    out = jax.block_until_ready(out)

    assert out.shape == (2, CLASS_NUM, IMAGE_SIZE, IMAGE_SIZE), out.shape
    assert bool(jnp.all(jnp.isfinite(out)))
    print("KERNEL_OK")
</pallas_src>

<mosaic_0001>
module attributes {stable_mosaic.version = 11 : i64} {
  func.func @_matmul_affine_kernel(%arg0: i32, %arg1: i32, %arg2: i32, %arg3: memref<256x128xbf16, #tpu.memory_space<vmem>>, %arg4: memref<128x128xbf16, #tpu.memory_space<vmem>>, %arg5: memref<1x128xf32, #tpu.memory_space<vmem>>, %arg6: memref<1x128xf32, #tpu.memory_space<vmem>>, %arg7: memref<256x128xbf16, #tpu.memory_space<vmem>>, %arg8: memref<256x128xf32, #tpu.memory_space<vmem>>) attributes {dimension_semantics = [#tpu.dimension_semantics<parallel>, #tpu.dimension_semantics<parallel>, #tpu.dimension_semantics<arbitrary>], iteration_bounds = array<i64: 5, 1, 1>, scalar_prefetch = 0 : i64, scratch_operands = 1 : i64, tpu.core_type = #tpu.core_type<tc>, window_params = [{transform_indices = @transform_0, window_bounds = array<i64: 256, 128>}, {transform_indices = @transform_1, window_bounds = array<i64: 128, 128>}, {transform_indices = @transform_2, window_bounds = array<i64: 1, 128>}, {transform_indices = @transform_3, window_bounds = array<i64: 1, 128>}, {transform_indices = @transform_4, window_bounds = array<i64: 256, 128>}]} {
    %c0_i32 = arith.constant 0 : i32
    %0 = arith.cmpi eq, %arg2, %c0_i32 : i32
    %1 = arith.extui %0 : i1 to i32
    %c0_i32_0 = arith.constant 0 : i32
    %2 = arith.cmpi ne, %1, %c0_i32_0 : i32
    scf.if %2 {
      %cst_10 = arith.constant 0.000000e+00 : f32
      %12 = vector.broadcast %cst_10 : f32 to vector<256x128xf32>
      %c0_11 = arith.constant 0 : index
      %c0_12 = arith.constant 0 : index
      %13 = vector.load %arg8[%c0_11, %c0_12] : memref<256x128xf32, #tpu.memory_space<vmem>>, vector<256x128xf32>
      tpu.vector_store %arg8[%c0_11, %c0_12], %12 {strides = array<i32>} : memref<256x128xf32, #tpu.memory_space<vmem>>, vector<256x128xf32>,
    } else {
    }
    %c0 = arith.constant 0 : index
    %c0_1 = arith.constant 0 : index
    %3 = vector.load %arg8[%c0, %c0_1] : memref<256x128xf32, #tpu.memory_space<vmem>>, vector<256x128xf32>
    %c0_2 = arith.constant 0 : index
    %c0_3 = arith.constant 0 : index
    %4 = vector.load %arg3[%c0_2, %c0_3] : memref<256x128xbf16, #tpu.memory_space<vmem>>, vector<256x128xbf16>
    %c0_4 = arith.constant 0 : index
    %c0_5 = arith.constant 0 : index
    %5 = vector.load %arg4[%c0_4, %c0_5] : memref<128x128xbf16, #tpu.memory_space<vmem>>, vector<128x128xbf16>
    %cst = arith.constant dense<0.000000e+00> : vector<256x128xf32>
    %6 = tpu.matmul %4, %5, %cst {dimension_numbers = #tpu.dot_dimension_numbers<[1], [0], [0], [1], [0, 0, 1, 1], [], []>} : vector<256x128xbf16>, vector<128x128xbf16>, vector<256x128xf32> -> vector<256x128xf32>
    %7 = arith.addf %3, %6 : vector<256x128xf32>
    %c0_6 = arith.constant 0 : index
    %c0_7 = arith.constant 0 : index
    %8 = vector.load %arg8[%c0_6, %c0_7] : memref<256x128xf32, #tpu.memory_space<vmem>>, vector<256x128xf32>
    tpu.vector_store %arg8[%c0_6, %c0_7], %7 {strides = array<i32>} : memref<256x128xf32, #tpu.memory_space<vmem>>, vector<256x128xf32>,
    %c0_i32_8 = arith.constant 0 : i32
    %9 = arith.cmpi eq, %arg2, %c0_i32_8 : i32
    %10 = arith.extui %9 : i1 to i32
    %c0_i32_9 = arith.constant 0 : i32
    %11 = arith.cmpi ne, %10, %c0_i32_9 : i32
    scf.if %11 {
      %c0_10 = arith.constant 0 : index
      %c0_11 = arith.constant 0 : index
      %12 = vector.load %arg8[%c0_10, %c0_11] : memref<256x128xf32, #tpu.memory_space<vmem>>, vector<256x128xf32>
      %c0_12 = arith.constant 0 : index
      %c0_13 = arith.constant 0 : index
      %13 = vector.load %arg5[%c0_12, %c0_13] : memref<1x128xf32, #tpu.memory_space<vmem>>, vector<1x128xf32>
      %14 = vector.broadcast %13 : vector<1x128xf32> to vector<256x128xf32>
      %15 = arith.mulf %12, %14 : vector<256x128xf32>
      %c0_14 = arith.constant 0 : index
      %c0_15 = arith.constant 0 : index
      %16 = vector.load %arg6[%c0_14, %c0_15] : memref<1x128xf32, #tpu.memory_space<vmem>>, vector<1x128xf32>
      %17 = vector.broadcast %16 : vector<1x128xf32> to vector<256x128xf32>
      %18 = arith.addf %15, %17 : vector<256x128xf32>
      %cst_16 = arith.constant 0.000000e+00 : f32
      %19 = vector.broadcast %cst_16 : f32 to vector<256x128xf32>
      %20 = arith.maximumf %18, %19 : vector<256x128xf32>
      %21 = arith.truncf %20 : vector<256x128xf32> to vector<256x128xbf16>
      %c0_17 = arith.constant 0 : index
      %c0_18 = arith.constant 0 : index
      %22 = vector.load %arg7[%c0_17, %c0_18] : memref<256x128xbf16, #tpu.memory_space<vmem>>, vector<256x128xbf16>
      tpu.vector_store %arg7[%c0_17, %c0_18], %21 {strides = array<i32>} : memref<256x128xbf16, #tpu.memory_space<vmem>>, vector<256x128xbf16>,
    } else {
    }
    return
  }
  func.func @transform_0(%arg0: i32, %arg1: i32, %arg2: i32) -> (i32, i32) {
    %c0_i32 = arith.constant 0 : i32
    return %arg0, %arg2 : i32, i32
  }
  func.func @transform_1(%arg0: i32, %arg1: i32, %arg2: i32) -> (i32, i32) {
    %c0_i32 = arith.constant 0 : i32
    return %arg2, %arg1 : i32, i32
  }
  func.func @transform_2(%arg0: i32, %arg1: i32, %arg2: i32) -> (i32, i32) {
    %c0_i32 = arith.constant 0 : i32
    %c0_i32_0 = arith.constant 0 : i32
    return %c0_i32, %arg1 : i32, i32
  }
  func.func @transform_3(%arg0: i32, %arg1: i32, %arg2: i32) -> (i32, i32) {
    %c0_i32 = arith.constant 0 : i32
    %c0_i32_0 = arith.constant 0 : i32
    return %c0_i32, %arg1 : i32, i32
  }
  func.func @transform_4(%arg0: i32, %arg1: i32, %arg2: i32) -> (i32, i32) {
    %c0_i32 = arith.constant 0 : i32
    return %arg0, %arg1 : i32, i32
  }
}

</mosaic_0001>

<llo_original>
// kernel: tpu_custom_call.1
$region0: #{tpu_custom_call.1}
  #allocation0 [shape = 'u32[]', space=smem, size = 0x4, offset = 0x4, fixed_abs, tag = 'smem constant byte address 0x4 - core index']
  #allocation1 [shape = 'u32[144,128]{1,0:T(1,128)}', space=vmem, size = 0x12000, scoped, tag = 'internal scratch']
  #allocation2 [shape = 'f32[256,128]{1,0:T(8,128)}', space=vmem, size = 0x20000, scoped, tag = 'scratch operand']
  %s0 = inlined_call_operand.hbm [shape: bf16[1280,128], index: 0, kind: input, shape index: {}]
  %s1 = inlined_call_operand.hbm [shape: bf16[128,128], index: 1, kind: input, shape index: {}]
  %s2 = inlined_call_operand.vmem [shape: f32[1,128], index: 2, kind: input, shape index: {}]
  %s3 = inlined_call_operand.vmem [shape: f32[1,128], index: 3, kind: input, shape index: {}]
  %s4 = inlined_call_operand.hbm [shape: bf16[1280,128], index: 4, kind: output, shape index: {}]
  %s5 = sld [smem:[#allocation0]]
  $region65: #{tpu_custom_call.1} parent=0
    _
  %s7 = ssub.s32 1, %s5
  %s8 = scalar_select 0, %s7, %s5
  $region1: #{tpu_custom_call.1} parent=0
    #allocation3 [shape = 'u8[131072]{0}', space=vmem, size = 0x20000, scoped, tag = 'input window, operand 0']
    #allocation4 [shape = 's32[2]{0}', space=sflag, size = 0x8, scoped, tag = 'scoped memory for tpu_custom_call.1']
    #allocation5 [shape = 's32[2]{0}', space=sflag, size = 0x8, scoped, tag = 'scoped memory for tpu_custom_call.1']
    #allocation6 [shape = 'u8[32768]{0}', space=vmem, size = 0x8000, scoped, tag = 'input window, operand 1, single buffered']
    #allocation7 [shape = 's32[1]{0}', space=sflag, size = 0x4, scoped, tag = 'scoped memory for tpu_custom_call.1']
    #allocation8 [shape = 'u8[131072]{0}', space=vmem, size = 0x20000, scoped, tag = 'output window, operand 0']
    %9 = vsyncpa [#allocation4], 0
    %s10 = scalar_lea.sflag [#allocation4], 1
    %11 = vsyncpa %s10, 0
    %12 = vsyncpa [#allocation7], 0
    %13 = vsyncpa [#allocation5], 0
    %s14 = scalar_lea.sflag [#allocation5], 1
    %15 = vsyncpa %s14, 0
    loop: start=0, step=1, limit=7
    $region2: #{tpu_custom_call.1} parent=1 // loop_pre_header
      _
    $region3: #{tpu_custom_call.1} parent=1 // loop_header
      %s17 = sphi 0, %s21
      %p18 = scmp.ge.s32.totalorder %s17, 7
      %s24 = sphi 0, %s43
      %s25 = sphi 0, %s39
      %s26 = sphi 0, %s35
      %s27 = sphi 0, %s24
      %s28 = sphi 0, %s25
      %s29 = sphi 0, %s26
      %s30 = sphi 0, %s27
      %s31 = sphi 0, %s28
      %s32 = sphi 0, %s29
      %s48 = sphi 0, %s50
      %s51 = sphi 0, %s48
      %s52 = sphi 0, %s51
      %s68 = sphi 0, %s52
      %s76 = sphi 0, %s78
      %s79 = sphi 0, %s76
      %s80 = sphi 0, %s79
      %s96 = sphi 0, %s80
      %s102 = sphi 0, %s104
      %s105 = sphi 0, %s102
      %s106 = sphi 0, %s105
      %s122 = sphi 0, %s106
      %s128 = sphi 0, %s130
      %s131 = sphi 0, %s128
      %s132 = sphi 0, %s131
      %s148 = sphi 0, %s132
      %s156 = sphi 0, %s158
      %s159 = sphi 0, %s156
      %s160 = sphi 0, %s159
      %s176 = sphi 0, %s160
    $region4: #{tpu_custom_call.1} parent=1 // loop_header_branch
      %20 = sbr.rel (%p18) target = $region8
    $region5: #{tpu_custom_call.1} parent=1 // loop_body
      %s22 = ssub.s32 %s17, 1
      %s23 = ssub.s32 %s17, 2
      %s33 = sadd.s32 1, %s26
      %p34 = scmp.ge.s32.totalorder %s33, 1
      %s35 = scalar_select %p34, 0, %s33
      %s36 = sadd.s32 1, %s25
      %s37 = scalar_select %p34, %s36, %s25
      %p38 = scmp.ge.s32.totalorder %s37, 1
      %s39 = scalar_select %p38, 0, %s37
      %s40 = sadd.s32 1, %s24
      %s41 = scalar_select %p38, %s40, %s24
      %p42 = scmp.ge.s32.totalorder %s41, 5
      %s43 = scalar_select %p42, 0, %s41
      %s44 = ssub.s32 %s24, %s43
      %s45 = ssub.s32 %s26, %s35
      %s46 = sor.u32 %s44, %s45
      %p47 = scmp.eq.s32.totalorder %s46, 0
      %s49 = sadd.s32 %s48, 1
      %s50 = scalar_select %p47, %s48, %s49
      %p53 = pneg %p47
      %p54 = scmp.eq.s32.totalorder %s17, 4
      %p55 = por %p53, %p54
      %p56 = scmp.ne.s32.totalorder %s48, %s51
      %p57 = scmp.eq.s32.totalorder %s17, 0
      %p58 = por %p56, %p57
      %p59 = scmp.ne.s32.totalorder %s48, %s51
      %p60 = scmp.eq.s32.totalorder %s22, 4
      %p61 = por %p59, %p60
      %p62 = scmp.ne.s32.totalorder %s51, %s52
      %p63 = scmp.eq.s32.totalorder %s22, 0
      %p64 = por %p62, %p63
      %p65 = scmp.ne.s32.totalorder %s51, %s52
      %p66 = scmp.eq.s32.totalorder %s23, 4
      %p67 = por %p65, %p66
      %p69 = scmp.ne.s32.totalorder %s52, %s68
      %p70 = scmp.eq.s32.totalorder %s23, 0
      %p71 = por %p69, %p70
      %s72 = ssub.s32 %s26, %s35
      %s73 = ssub.s32 %s25, %s39
      %s74 = sor.u32 %s72, %s73
      %p75 = scmp.eq.s32.totalorder %s74, 0
      %s77 = sadd.s32 %s76, 1
      %s78 = scalar_select %p75, %s76, %s77
      %p81 = pneg %p75
      %p82 = scmp.eq.s32.totalorder %s17, 4
      %p83 = por %p81, %p82
      %p84 = scmp.ne.s32.totalorder %s76, %s79
      %p85 = scmp.eq.s32.totalorder %s17, 0
      %p86 = por %p84, %p85
      %p87 = scmp.ne.s32.totalorder %s76, %s79
      %p88 = scmp.eq.s32.totalorder %s22, 4
      %p89 = por %p87, %p88
      %p90 = scmp.ne.s32.totalorder %s79, %s80
      %p91 = scmp.eq.s32.totalorder %s22, 0
      %p92 = por %p90, %p91
      %p93 = scmp.ne.s32.totalorder %s79, %s80
      %p94 = scmp.eq.s32.totalorder %s23, 4
      %p95 = por %p93, %p94
      %p97 = scmp.ne.s32.totalorder %s80, %s96
      %p98 = scmp.eq.s32.totalorder %s23, 0
      %p99 = por %p97, %p98
      %s100 = ssub.s32 %s25, %s39
      %p101 = scmp.eq.s32.totalorder %s100, 0
      %s103 = sadd.s32 %s102, 1
      %s104 = scalar_select %p101, %s102, %s103
      %p107 = pneg %p101
      %p108 = scmp.eq.s32.totalorder %s17, 4
      %p109 = por %p107, %p108
      %p110 = scmp.ne.s32.totalorder %s102, %s105
      %p111 = scmp.eq.s32.totalorder %s17, 0
      %p112 = por %p110, %p111
      %p113 = scmp.ne.s32.totalorder %s102, %s105
      %p114 = scmp.eq.s32.totalorder %s22, 4
      %p115 = por %p113, %p114
      %p116 = scmp.ne.s32.totalorder %s105, %s106
      %p117 = scmp.eq.s32.totalorder %s22, 0
      %p118 = por %p116, %p117
      %p119 = scmp.ne.s32.totalorder %s105, %s106
      %p120 = scmp.eq.s32.totalorder %s23, 4
      %p121 = por %p119, %p120
      %p123 = scmp.ne.s32.totalorder %s106, %s122
      %p124 = scmp.eq.s32.totalorder %s23, 0
      %p125 = por %p123, %p124
      %s126 = ssub.s32 %s25, %s39
      %p127 = scmp.eq.s32.totalorder %s126, 0
      %s129 = sadd.s32 %s128, 1
      %s130 = scalar_select %p127, %s128, %s129
      %p133 = pneg %p127
      %p134 = scmp.eq.s32.totalorder %s17, 4
      %p135 = por %p133, %p134
      %p136 = scmp.ne.s32.totalorder %s128, %s131
      %p137 = scmp.eq.s32.totalorder %s17, 0
      %p138 = por %p136, %p137
      %p139 = scmp.ne.s32.totalorder %s128, %s131
      %p140 = scmp.eq.s32.totalorder %s22, 4
      %p141 = por %p139, %p140
      %p142 = scmp.ne.s32.totalorder %s131, %s132
      %p143 = scmp.eq.s32.totalorder %s22, 0
      %p144 = por %p142, %p143
      %p145 = scmp.ne.s32.totalorder %s131, %s132
      %p146 = scmp.eq.s32.totalorder %s23, 4
      %p147 = por %p145, %p146
      %p149 = scmp.ne.s32.totalorder %s132, %s148
      %p150 = scmp.eq.s32.totalorder %s23, 0
      %p151 = por %p149, %p150
      %s152 = ssub.s32 %s24, %s43
      %s153 = ssub.s32 %s25, %s39
      %s154 = sor.u32 %s152, %s153
      %p155 = scmp.eq.s32.totalorder %s154, 0
      %s157 = sadd.s32 %s156, 1
      %s158 = scalar_select %p155, %s156, %s157
      %p161 = pneg %p155
      %p162 = scmp.eq.s32.totalorder %s17, 4
      %p163 = por %p161, %p162
      %p164 = scmp.ne.s32.totalorder %s156, %s159
      %p165 = scmp.eq.s32.totalorder %s17, 0
      %p166 = por %p164, %p165
      %p167 = scmp.ne.s32.totalorder %s156, %s159
      %p168 = scmp.eq.s32.totalorder %s22, 4
      %p169 = por %p167, %p168
      %p170 = scmp.ne.s32.totalorder %s159, %s160
      %p171 = scmp.eq.s32.totalorder %s22, 0
      %p172 = por %p170, %p171
      %p173 = scmp.ne.s32.totalorder %s159, %s160
      %p174 = scmp.eq.s32.totalorder %s23, 4
      %p175 = por %p173, %p174
      %p177 = scmp.ne.s32.totalorder %s160, %s176
      %p178 = scmp.eq.s32.totalorder %s23, 0
      %p179 = por %p177, %p178
      %p180 = scmp.le.s32.totalorder 1, %s17
      %p181 = scmp.lt.s32.totalorder %s17, 6
      %p182 = pnand %p180, %p181
      %p183 = pneg %p182
      // Predicated region
      $region9: #{tpu_custom_call.1} parent=5 // pred_check
        _
      $region10: #{tpu_custom_call.1} parent=5 // pred_check_branch
        %185 = sbr.rel (%p182) target = $region12
      $region11: #{tpu_custom_call.1} parent=5 // pred_region
        %s186 = ssub.s32 %s17, 1
        // Predicated region
        $region13: #{tpu_custom_call.1} parent=11 // pred_check
          %p187 = pneg %p92
        $region14: #{tpu_custom_call.1} parent=11 // pred_check_branch
          %189 = sbr.rel (%p187) target = $region16
        $region15: #{tpu_custom_call.1} parent=11 // pred_region
          %s190 = smul.u32 16, %s29
          %s192 = ssub.s32 1024, 1024
          %193 = vsyncadd [#allocation7], %s192
          %s194 = sadd.s32 %s28, %s190
          %s195 = smul.addr %s194, 64
          %s196 = scalar_lea.hbm %s1, %s195
          %s197 = sshll.u32 [#allocation6], 4
          %s198 = int_to_ptr.vmem [resolvable:$true] %s197
          %203 = dma.hbm_to_vmem [thread:$0]  %s196, 1024, %s198, [#allocation7], 64, 64, 4
        $region16: #{tpu_custom_call.1} parent=11 // pred_fallthru
          _
        // Predicated region
        $region17: #{tpu_custom_call.1} parent=11 // pred_check
          %p204 = pneg %p118
        $region18: #{tpu_custom_call.1} parent=11 // pred_check_branch
          %206 = sbr.rel (%p204) target = $region20
        $region19: #{tpu_custom_call.1} parent=11 // pred_region
          %p207 = scmp.lt.s32.totalorder %s28, 0
          %s208 = scalar_select %p207, %s28, 0
          %s209 = scalar_lea.vmem %s2, %s208
        $region20: #{tpu_custom_call.1} parent=11 // pred_fallthru
          _
        // Predicated region
        $region21: #{tpu_custom_call.1} parent=11 // pred_check
          %p210 = pneg %p144
        $region22: #{tpu_custom_call.1} parent=11 // pred_check_branch
          %212 = sbr.rel (%p210) target = $region24
        $region23: #{tpu_custom_call.1} parent=11 // pred_region
          %p213 = scmp.lt.s32.totalorder %s28, 0
          %s214 = scalar_select %p213, %s28, 0
          %s215 = scalar_lea.vmem %s3, %s214
        $region24: #{tpu_custom_call.1} parent=11 // pred_fallthru
          _
      $region12: #{tpu_custom_call.1} parent=5 // pred_fallthru
        _
      %p216 = scmp.lt.s32.totalorder %s17, 5
      // Predicated region
      $region25: #{tpu_custom_call.1} parent=5 // pred_check
        %p217 = pneg %p216
      $region26: #{tpu_custom_call.1} parent=5 // pred_check_branch
        %219 = sbr.rel (%p217) target = $region28
      $region27: #{tpu_custom_call.1} parent=5 // pred_region
        // Predicated region
        $region29: #{tpu_custom_call.1} parent=27 // pred_check
          %p220 = pneg %p58
        $region30: #{tpu_custom_call.1} parent=27 // pred_check_branch
          %222 = sbr.rel (%p220) target = $region32
        $region31: #{tpu_custom_call.1} parent=27 // pred_region
          %s223 = sand.u32 %s48, 1
          %s224 = scalar_lea.sflag [#allocation4], %s223
          %s225 = sand.u32 %s48, 1
          %s226 = smul.addr %s225, 128
          %s227 = scalar_lea.vmem [#allocation3], %s226
          %s228 = smul.u32 32, %s24
          %s230 = ssub.s32 2048, 2048
          %231 = vsyncadd %s224, %s230
          %s232 = sadd.s32 %s26, %s228
          %s233 = smul.addr %s232, 64
          %s234 = scalar_lea.hbm %s0, %s233
          %s235 = sshll.u32 %s227, 4
          %s236 = int_to_ptr.vmem [resolvable:$true] %s235
          %241 = dma.hbm_to_vmem [thread:$0]  %s234, 2048, %s236, %s224, 64, 64, 4
        $region32: #{tpu_custom_call.1} parent=27 // pred_fallthru
          _
      $region28: #{tpu_custom_call.1} parent=5 // pred_fallthru
        _
      %p242 = scmp.le.s32.totalorder 1, %s17
      %p243 = scmp.lt.s32.totalorder %s17, 6
      %p244 = pnand %p242, %p243
      %p245 = pneg %p244
      // Predicated region
      $region33: #{tpu_custom_call.1} parent=5 // pred_check
        _
      $region34: #{tpu_custom_call.1} parent=5 // pred_check_branch
        %247 = sbr.rel (%p244) target = $region36
      $region35: #{tpu_custom_call.1} parent=5 // pred_region
        %s248 = ssub.s32 %s17, 1
        %s249 = sand.u32 %s51, 1
        %s250 = scalar_lea.sflag [#allocation4], %s249
        %s251 = sand.u32 %s51, 1
        %s252 = smul.addr %s251, 128
        %s253 = scalar_lea.vmem [#allocation3], %s252
        // Predicated region
        $region37: #{tpu_custom_call.1} parent=35 // pred_check
          %p254 = pneg %p64
        $region38: #{tpu_custom_call.1} parent=35 // pred_check_branch
          %256 = sbr.rel (%p254) target = $region40
        $region39: #{tpu_custom_call.1} parent=35 // pred_region
          %257 = dma.done %s250, 2048
        $region40: #{tpu_custom_call.1} parent=35 // pred_fallthru
          _
        // Predicated region
        $region41: #{tpu_custom_call.1} parent=35 // pred_check
          %p258 = pneg %p92
        $region42: #{tpu_custom_call.1} parent=35 // pred_check_branch
          %260 = sbr.rel (%p258) target = $region44
        $region43: #{tpu_custom_call.1} parent=35 // pred_region
          %261 = dma.done [#allocation7], 1024
        $region44: #{tpu_custom_call.1} parent=35 // pred_fallthru
          _
        %s262 = sand.u32 %s51, 1
        %s263 = scalar_lea.sflag [#allocation4], %s262
        %s264 = sand.u32 %s51, 1
        %s265 = smul.addr %s264, 128
        %s266 = scalar_lea.vmem [#allocation3], %s265
        %p267 = pneg %p64
        %p268 = pneg %p61
        %p269 = pneg %p92
        %p270 = pneg %p89
        %p271 = scmp.lt.s32.totalorder %s28, 0
        %s272 = scalar_select %p271, %s28, 0
        %s273 = scalar_lea.vmem %s2, %s272
        %p274 = pneg %p118
        %p275 = pneg %p115
        %p276 = scmp.lt.s32.totalorder %s28, 0
        %s277 = scalar_select %p276, %s28, 0
        %s278 = scalar_lea.vmem %s3, %s277
        %p279 = pneg %p144
        %p280 = pneg %p141
        %p281 = pneg %p172
        %p282 = pneg %p169
        %s283 = sand.u32 %s159, 1
        %s284 = scalar_lea.sflag [#allocation5], %s283
        %s285 = sand.u32 %s159, 1
        %s286 = smul.addr %s285, 128
        %s287 = scalar_lea.vmem [#allocation8], %s286
        %s288 = smul.u32 32, %s27
        %s289 = smul.u32 16, %s29
        %p290 = scmp.lt.s32.totalorder %s28, 0
        %s291 = scalar_select %p290, %s28, 0
        %s292 = scalar_lea.vmem %s2, %s291
        %p293 = scmp.lt.s32.totalorder %s28, 0
        %s294 = scalar_select %p293, %s28, 0
        %s295 = scalar_lea.vmem %s3, %s294
        %s296 = smul.u32 32, %s27
        %p298 = scmp.eq.s32.totalorder %s29, 0
        // Predicated region
        $region45: #{tpu_custom_call.1} parent=35 // pred_check
          %p299 = pneg %p298
        $region46: #{tpu_custom_call.1} parent=35 // pred_check_branch
          %301 = sbr.rel (%p299) target = $region48
        $region47: #{tpu_custom_call.1} parent=35 // pred_region
          %302 = vst [vmem:[#allocation2] sm:$0xff] 0.0
          %303 = vst [vmem:[#allocation2 + $0x8] sm:$0xff] 0.0
          %304 = vst [vmem:[#allocation2 + $0x10] sm:$0xff] 0.0
          %305 = vst [vmem:[#allocation2 + $0x18] sm:$0xff] 0.0
          %306 = vst [vmem:[#allocation2 + $0x20] sm:$0xff] 0.0
          %307 = vst [vmem:[#allocation2 + $0x28] sm:$0xff] 0.0
          %308 = vst [vmem:[#allocation2 + $0x30] sm:$0xff] 0.0
          %309 = vst [vmem:[#allocation2 + $0x38] sm:$0xff] 0.0
          %310 = vst [vmem:[#allocation2 + $0x40] sm:$0xff] 0.0
          %311 = vst [vmem:[#allocation2 + $0x48] sm:$0xff] 0.0
          %312 = vst [vmem:[#allocation2 + $0x50] sm:$0xff] 0.0
          %313 = vst [vmem:[#allocation2 + $0x58] sm:$0xff] 0.0
          %314 = vst [vmem:[#allocation2 + $0x60] sm:$0xff] 0.0
          %315 = vst [vmem:[#allocation2 + $0x68] sm:$0xff] 0.0
          %316 = vst [vmem:[#allocation2 + $0x70] sm:$0xff] 0.0
          %317 = vst [vmem:[#allocation2 + $0x78] sm:$0xff] 0.0
          %318 = vst [vmem:[#allocation2 + $0x80] sm:$0xff] 0.0
          %319 = vst [vmem:[#allocation2 + $0x88] sm:$0xff] 0.0
          %320 = vst [vmem:[#allocation2 + $0x90] sm:$0xff] 0.0
          %321 = vst [vmem:[#allocation2 + $0x98] sm:$0xff] 0.0
          %322 = vst [vmem:[#allocation2 + $0xa0] sm:$0xff] 0.0
          %323 = vst [vmem:[#allocation2 + $0xa8] sm:$0xff] 0.0
          %324 = vst [vmem:[#allocation2 + $0xb0] sm:$0xff] 0.0
          %325 = vst [vmem:[#allocation2 + $0xb8] sm:$0xff] 0.0
          %326 = vst [vmem:[#allocation2 + $0xc0] sm:$0xff] 0.0
          %327 = vst [vmem:[#allocation2 + $0xc8] sm:$0xff] 0.0
          %328 = vst [vmem:[#allocation2 + $0xd0] sm:$0xff] 0.0
          %329 = vst [vmem:[#allocation2 + $0xd8] sm:$0xff] 0.0
          %330 = vst [vmem:[#allocation2 + $0xe0] sm:$0xff] 0.0
          %331 = vst [vmem:[#allocation2 + $0xe8] sm:$0xff] 0.0
          %332 = vst [vmem:[#allocation2 + $0xf0] sm:$0xff] 0.0
          %333 = vst [vmem:[#allocation2 + $0xf8] sm:$0xff] 0.0
        $region48: #{tpu_custom_call.1} parent=35 // pred_fallthru
          _
        %v334 = vld [vmem:[#allocation2] sm:$0xff]
        %v335 = vld [vmem:[#allocation2 + $0x8] sm:$0xff]
        %v336 = vld [vmem:[#allocation2 + $0x10] sm:$0xff]
        %v337 = vld [vmem:[#allocation2 + $0x18] sm:$0xff]
        %v338 = vld [vmem:[#allocation2 + $0x20] sm:$0xff]
        %v339 = vld [vmem:[#allocation2 + $0x28] sm:$0xff]
        %v340 = vld [vmem:[#allocation2 + $0x30] sm:$0xff]
        %v341 = vld [vmem:[#allocation2 + $0x38] sm:$0xff]
        %v342 = vld [vmem:[#allocation2 + $0x40] sm:$0xff]
        %v343 = vld [vmem:[#allocation2 + $0x48] sm:$0xff]
        %v344 = vld [vmem:[#allocation2 + $0x50] sm:$0xff]
        %v345 = vld [vmem:[#allocation2 + $0x58] sm:$0xff]
        %v346 = vld [vmem:[#allocation2 + $0x60] sm:$0xff]
        %v347 = vld [vmem:[#allocation2 + $0x68] sm:$0xff]
        %v348 = vld [vmem:[#allocation2 + $0x70] sm:$0xff]
        %v349 = vld [vmem:[#allocation2 + $0x78] sm:$0xff]
        %v350 = vld [vmem:[#allocation2 + $0x80] sm:$0xff]
        %v351 = vld [vmem:[#allocation2 + $0x88] sm:$0xff]
        %v352 = vld [vmem:[#allocation2 + $0x90] sm:$0xff]
        %v353 = vld [vmem:[#allocation2 + $0x98] sm:$0xff]
        %v354 = vld [vmem:[#allocation2 + $0xa0] sm:$0xff]
        %v355 = vld [vmem:[#allocation2 + $0xa8] sm:$0xff]
        %v356 = vld [vmem:[#allocation2 + $0xb0] sm:$0xff]
        %v357 = vld [vmem:[#allocation2 + $0xb8] sm:$0xff]
        %v358 = vld [vmem:[#allocation2 + $0xc0] sm:$0xff]
        %v359 = vld [vmem:[#allocation2 + $0xc8] sm:$0xff]
        %v360 = vld [vmem:[#allocation2 + $0xd0] sm:$0xff]
        %v361 = vld [vmem:[#allocation2 + $0xd8] sm:$0xff]
        %v362 = vld [vmem:[#allocation2 + $0xe0] sm:$0xff]
        %v363 = vld [vmem:[#allocation2 + $0xe8] sm:$0xff]
        %v364 = vld [vmem:[#allocation2 + $0xf0] sm:$0xff]
        %v365 = vld [vmem:[#allocation2 + $0xf8] sm:$0xff]
        %v366 = vld [vmem:[%s253] sm:$0xf]
        %v367 = vld [vmem:[%s253 + $0x4] sm:$0xf]
        %v368 = vld [vmem:[%s253 + $0x8] sm:$0xf]
        %v369 = vld [vmem:[%s253 + $0xc] sm:$0xf]
        %v370 = vld [vmem:[%s253 + $0x10] sm:$0xf]
        %v371 = vld [vmem:[%s253 + $0x14] sm:$0xf]
        %v372 = vld [vmem:[%s253 + $0x18] sm:$0xf]
        %v373 = vld [vmem:[%s253 + $0x1c] sm:$0xf]
        %v374 = vld [vmem:[%s253 + $0x20] sm:$0xf]
        %v375 = vld [vmem:[%s253 + $0x24] sm:$0xf]
        %v376 = vld [vmem:[%s253 + $0x28] sm:$0xf]
        %v377 = vld [vmem:[%s253 + $0x2c] sm:$0xf]
        %v378 = vld [vmem:[%s253 + $0x30] sm:$0xf]
        %v379 = vld [vmem:[%s253 + $0x34] sm:$0xf]
        %v380 = vld [vmem:[%s253 + $0x38] sm:$0xf]
        %v381 = vld [vmem:[%s253 + $0x3c] sm:$0xf]
        %v382 = vld [vmem:[%s253 + $0x40] sm:$0xf]
        %v383 = vld [vmem:[%s253 + $0x44] sm:$0xf]
        %v384 = vld [vmem:[%s253 + $0x48] sm:$0xf]
        %v385 = vld [vmem:[%s253 + $0x4c] sm:$0xf]
        %v386 = vld [vmem:[%s253 + $0x50] sm:$0xf]
        %v387 = vld [vmem:[%s253 + $0x54] sm:$0xf]
        %v388 = vld [vmem:[%s253 + $0x58] sm:$0xf]
        %v389 = vld [vmem:[%s253 + $0x5c] sm:$0xf]
        %v390 = vld [vmem:[%s253 + $0x60] sm:$0xf]
        %v391 = vld [vmem:[%s253 + $0x64] sm:$0xf]
        %v392 = vld [vmem:[%s253 + $0x68] sm:$0xf]
        %v393 = vld [vmem:[%s253 + $0x6c] sm:$0xf]
        %v394 = vld [vmem:[%s253 + $0x70] sm:$0xf]
        %v395 = vld [vmem:[%s253 + $0x74] sm:$0xf]
        %v396 = vld [vmem:[%s253 + $0x78] sm:$0xf]
        %v397 = vld [vmem:[%s253 + $0x7c] sm:$0xf]
        %v398 = vld [vmem:[#allocation6] sm:$0xf]
        %v399 = vld [vmem:[#allocation6 + $0x4] sm:$0xf]
        %v400 = vld [vmem:[#allocation6 + $0x8] sm:$0xf]
        %v401 = vld [vmem:[#allocation6 + $0xc] sm:$0xf]
        %v402 = vld [vmem:[#allocation6 + $0x10] sm:$0xf]
        %v403 = vld [vmem:[#allocation6 + $0x14] sm:$0xf]
        %v404 = vld [vmem:[#allocation6 + $0x18] sm:$0xf]
        %v405 = vld [vmem:[#allocation6 + $0x1c] sm:$0xf]
        %v406 = vld [vmem:[#allocation6 + $0x20] sm:$0xf]
        %v407 = vld [vmem:[#allocation6 + $0x24] sm:$0xf]
        %v408 = vld [vmem:[#allocation6 + $0x28] sm:$0xf]
        %v409 = vld [vmem:[#allocation6 + $0x2c] sm:$0xf]
        %v410 = vld [vmem:[#allocation6 + $0x30] sm:$0xf]
        %v411 = vld [vmem:[#allocation6 + $0x34] sm:$0xf]
        %v412 = vld [vmem:[#allocation6 + $0x38] sm:$0xf]
        %v413 = vld [vmem:[#allocation6 + $0x3c] sm:$0xf]
        %v446 = vunpack.c.l.b16 %v366
        %v447 = vunpack.c.l.b16 %v367
        %v448 = vunpack.c.l.b16 %v368
        %v449 = vunpack.c.l.b16 %v369
        %v450 = vunpack.c.l.b16 %v370
        %v451 = vunpack.c.l.b16 %v371
        %v452 = vunpack.c.l.b16 %v372
        %v453 = vunpack.c.l.b16 %v373
        %v454 = vunpack.c.l.b16 %v374
        %v455 = vunpack.c.l.b16 %v375
        %v456 = vunpack.c.l.b16 %v376
        %v457 = vunpack.c.l.b16 %v377
        %v458 = vunpack.c.l.b16 %v378
        %v459 = vunpack.c.l.b16 %v379
        %v460 = vunpack.c.l.b16 %v380
        %v461 = vunpack.c.l.b16 %v381
        %v462 = vunpack.c.l.b16 %v382
        %v463 = vunpack.c.l.b16 %v383
        %v464 = vunpack.c.l.b16 %v384
        %v465 = vunpack.c.l.b16 %v385
        %v466 = vunpack.c.l.b16 %v386
        %v467 = vunpack.c.l.b16 %v387
        %v468 = vunpack.c.l.b16 %v388
        %v469 = vunpack.c.l.b16 %v389
        %v470 = vunpack.c.l.b16 %v390
        %v471 = vunpack.c.l.b16 %v391
        %v472 = vunpack.c.l.b16 %v392
        %v473 = vunpack.c.l.b16 %v393
        %v474 = vunpack.c.l.b16 %v394
        %v475 = vunpack.c.l.b16 %v395
        %v476 = vunpack.c.l.b16 %v396
        %v477 = vunpack.c.l.b16 %v397
        %v478 = vpack.c.b16 %v447, %v446
        %v479 = vpack.c.b16 %v449, %v448
        %v480 = vpack.c.b16 %v451, %v450
        %v481 = vpack.c.b16 %v453, %v452
        %v482 = vpack.c.b16 %v455, %v454
        %v483 = vpack.c.b16 %v457, %v456
        %v484 = vpack.c.b16 %v459, %v458
        %v485 = vpack.c.b16 %v461, %v460
        %v486 = vpack.c.b16 %v463, %v462
        %v487 = vpack.c.b16 %v465, %v464
        %v488 = vpack.c.b16 %v467, %v466
        %v489 = vpack.c.b16 %v469, %v468
        %v490 = vpack.c.b16 %v471, %v470
        %v491 = vpack.c.b16 %v473, %v472
        %v492 = vpack.c.b16 %v475, %v474
        %v493 = vpack.c.b16 %v477, %v476
        %v526 = vunpack.c.l.b16 %v398
        %v527 = vunpack.c.l.b16 %v399
        %v528 = vunpack.c.l.b16 %v400
        %v529 = vunpack.c.l.b16 %v401
        %v530 = vunpack.c.l.b16 %v402
        %v531 = vunpack.c.l.b16 %v403
        %v532 = vunpack.c.l.b16 %v404
        %v533 = vunpack.c.l.b16 %v405
        %v534 = vunpack.c.l.b16 %v406
        %v535 = vunpack.c.l.b16 %v407
        %v536 = vunpack.c.l.b16 %v408
        %v537 = vunpack.c.l.b16 %v409
        %v538 = vunpack.c.l.b16 %v410
        %v539 = vunpack.c.l.b16 %v411
        %v540 = vunpack.c.l.b16 %v412
        %v541 = vunpack.c.l.b16 %v413
        %v542 = vpack.c.b16 %v527, %v526
        %v543 = vpack.c.b16 %v529, %v528
        %v544 = vpack.c.b16 %v531, %v530
        %v545 = vpack.c.b16 %v533, %v532
        %v546 = vpack.c.b16 %v535, %v534
        %v547 = vpack.c.b16 %v537, %v536
        %v548 = vpack.c.b16 %v539, %v538
        %v549 = vpack.c.b16 %v541, %v540
        %558 = vmatprep.subr.bf16.mxu0 0
        %559 = vmatpush1.bf16.msra.mxu0 %v542
        %560 = vmatprep.subr.bf16.mxu0 0
        %561 = vmatpush1.bf16.msra.mxu0 %v543
        %562 = vmatprep.subr.bf16.mxu0 0
        %563 = vmatpush1.bf16.msra.mxu0 %v544
        %564 = vmatprep.subr.bf16.mxu0 0
        %565 = vmatpush1.bf16.msra.mxu0 %v545
        %566 = vmatprep.subr.bf16.mxu0 0
        %567 = vmatpush1.bf16.msra.mxu0 %v546
        %568 = vmatprep.subr.bf16.mxu0 0
        %569 = vmatpush1.bf16.msra.mxu0 %v547
        %570 = vmatprep.subr.bf16.mxu0 0
        %571 = vmatpush1.bf16.msra.mxu0 %v548
        %572 = vmatprep.subr.bf16.mxu0 0
        %573 = vmatpush1.bf16.msra.mxu0 %v549
        %574 = vmatprep.subr.bf16.mxu0 0
        %575 = vmatpush1.bf16.msra.mxu0 0
        %576 = vmatprep.subr.bf16.mxu0 0
        %577 = vmatpush1.bf16.msra.mxu0 0
        %578 = vmatprep.subr.bf16.mxu0 0
        %579 = vmatpush1.bf16.msra.mxu0 0
        %580 = vmatprep.subr.bf16.mxu0 0
        %581 = vmatpush1.bf16.msra.mxu0 0
        %582 = vmatprep.subr.bf16.mxu0 0
        %583 = vmatpush1.bf16.msra.mxu0 0
        %584 = vmatprep.subr.bf16.mxu0 0
        %585 = vmatpush1.bf16.msra.mxu0 0
        %586 = vmatprep.subr.bf16.mxu0 0
        %587 = vmatpush1.bf16.msra.mxu0 0
        %588 = vmatprep.subr.bf16.mxu0 0
        %589 = vmatpush1.bf16.msra.mxu0 0
        %590 = vmatprep.mubr.bf16.mxu0 0
        %591 = vmatmul.mubr.bf16.gmra.mrb[0].mxu0 %v478
        %v592 = vpop.f32.mrb[0].mxu0
        %v593 = vadd.f32 0.0, %v592
        %v594 = vpop.f32.mrb[0].mxu0
        %v595 = vpop.f32.mrb[0].mxu0
        %v596 = vadd.f32 0.0, %v595
        %v597 = vpop.f32.mrb[0].mxu0
        %598 = vmatprep.mubr.bf16.mxu0 0
        %599 = vmatmul.mubr.bf16.gmra.mrb[0].mxu0 %v479
        %v600 = vpop.f32.mrb[0].mxu0
        %v601 = vadd.f32 0.0, %v600
        %v602 = vpop.f32.mrb[0].mxu0
        %v603 = vpop.f32.mrb[0].mxu0
        %v604 = vadd.f32 0.0, %v603
        %v605 = vpop.f32.mrb[0].mxu0
        %606 = vmatprep.mubr.bf16.mxu0 0
        %607 = vmatmul.mubr.bf16.gmra.mrb[0].mxu0 %v480
        %v608 = vpop.f32.mrb[0].mxu0
        %v609 = vadd.f32 0.0, %v608
        %v610 = vpop.f32.mrb[0].mxu0
        %v611 = vpop.f32.mrb[0].mxu0
        %v612 = vadd.f32 0.0, %v611
        %v613 = vpop.f32.mrb[0].mxu0
        %614 = vmatprep.mubr.bf16.mxu0 0
        %615 = vmatmul.mubr.bf16.gmra.mrb[0].mxu0 %v481
        %v616 = vpop.f32.mrb[0].mxu0
        %v617 = vadd.f32 0.0, %v616
        %v618 = vpop.f32.mrb[0].mxu0
        %v619 = vpop.f32.mrb[0].mxu0
        %v620 = vadd.f32 0.0, %v619
        %v621 = vpop.f32.mrb[0].mxu0
        %622 = vmatprep.mubr.bf16.mxu0 0
        %623 = vmatmul.mubr.bf16.gmra.mrb[0].mxu0 %v482
        %v624 = vpop.f32.mrb[0].mxu0
        %v625 = vadd.f32 0.0, %v624
        %v626 = vpop.f32.mrb[0].mxu0
        %v627 = vpop.f32.mrb[0].mxu0
        %v628 = vadd.f32 0.0, %v627
        %v629 = vpop.f32.mrb[0].mxu0
        %630 = vmatprep.mubr.bf16.mxu0 0
        %631 = vmatmul.mubr.bf16.gmra.mrb[0].mxu0 %v483
        %v632 = vpop.f32.mrb[0].mxu0
        %v633 = vadd.f32 0.0, %v632
        %v634 = vpop.f32.mrb[0].mxu0
        %v635 = vpop.f32.mrb[0].mxu0
        %v636 = vadd.f32 0.0, %v635
        %v637 = vpop.f32.mrb[0].mxu0
        %638 = vmatprep.mubr.bf16.mxu0 0
        %639 = vmatmul.mubr.bf16.gmra.mrb[0].mxu0 %v484
        %v640 = vpop.f32.mrb[0].mxu0
        %v641 = vadd.f32 0.0, %v640
        %v642 = vpop.f32.mrb[0].mxu0
        %v643 = vpop.f32.mrb[0].mxu0
        %v644 = vadd.f32 0.0, %v643
        %v645 = vpop.f32.mrb[0].mxu0
        %646 = vmatprep.mubr.bf16.mxu0 0
        %647 = vmatmul.mubr.bf16.gmra.mrb[0].mxu0 %v485
        %v648 = vpop.f32.mrb[0].mxu0
        %v649 = vadd.f32 0.0, %v648
        %v650 = vpop.f32.mrb[0].mxu0
        %v651 = vpop.f32.mrb[0].mxu0
        %v652 = vadd.f32 0.0, %v651
        %v653 = vpop.f32.mrb[0].mxu0
        %654 = vmatprep.mubr.bf16.mxu0 0
        %655 = vmatmul.mubr.bf16.gmra.mrb[0].mxu0 %v486
        %v656 = vpop.f32.mrb[0].mxu0
        %v657 = vadd.f32 0.0, %v656
        %v658 = vpop.f32.mrb[0].mxu0
        %v659 = vpop.f32.mrb[0].mxu0
        %v660 = vadd.f32 0.0, %v659
        %v661 = vpop.f32.mrb[0].mxu0
        %662 = vmatprep.mubr.bf16.mxu0 0
        %663 = vmatmul.mubr.bf16.gmra.mrb[0].mxu0 %v487
        %v664 = vpop.f32.mrb[0].mxu0
        %v665 = vadd.f32 0.0, %v664
        %v666 = vpop.f32.mrb[0].mxu0
        %v667 = vpop.f32.mrb[0].mxu0
        %v668 = vadd.f32 0.0, %v667
        %v669 = vpop.f32.mrb[0].mxu0
        %670 = vmatprep.mubr.bf16.mxu0 0
        %671 = vmatmul.mubr.bf16.gmra.mrb[0].mxu0 %v488
        %v672 = vpop.f32.mrb[0].mxu0
        %v673 = vadd.f32 0.0, %v672
        %v674 = vpop.f32.mrb[0].mxu0
        %v675 = vpop.f32.mrb[0].mxu0
        %v676 = vadd.f32 0.0, %v675
        %v677 = vpop.f32.mrb[0].mxu0
        %678 = vmatprep.mubr.bf16.mxu0 0
        %679 = vmatmul.mubr.bf16.gmra.mrb[0].mxu0 %v489
        %v680 = vpop.f32.mrb[0].mxu0
        %v681 = vadd.f32 0.0, %v680
        %v682 = vpop.f32.mrb[0].mxu0
        %v683 = vpop.f32.mrb[0].mxu0
        %v684 = vadd.f32 0.0, %v683
        %v685 = vpop.f32.mrb[0].mxu0
        %686 = vmatprep.mubr.bf16.mxu0 0
        %687 = vmatmul.mubr.bf16.gmra.mrb[0].mxu0 %v490
        %v688 = vpop.f32.mrb[0].mxu0
        %v689 = vadd.f32 0.0, %v688
        %v690 = vpop.f32.mrb[0].mxu0
        %v691 = vpop.f32.mrb[0].mxu0
        %v692 = vadd.f32 0.0, %v691
        %v693 = vpop.f32.mrb[0].mxu0
        %694 = vmatprep.mubr.bf16.mxu0 0
        %695 = vmatmul.mubr.bf16.gmra.mrb[0].mxu0 %v491
        %v696 = vpop.f32.mrb[0].mxu0
        %v697 = vadd.f32 0.0, %v696
        %v698 = vpop.f32.mrb[0].mxu0
        %v699 = vpop.f32.mrb[0].mxu0
        %v700 = vadd.f32 0.0, %v699
        %v701 = vpop.f32.mrb[0].mxu0
        %702 = vmatprep.mubr.bf16.mxu0 0
        %703 = vmatmul.mubr.bf16.gmra.mrb[0].mxu0 %v492
        %v704 = vpop.f32.mrb[0].mxu0
        %v705 = vadd.f32 0.0, %v704
        %v706 = vpop.f32.mrb[0].mxu0
        %v707 = vpop.f32.mrb[0].mxu0
        %v708 = vadd.f32 0.0, %v707
        %v709 = vpop.f32.mrb[0].mxu0
        %710 = vmatprep.mubr.bf16.mxu0 0
        %711 = vmatmul.mubr.bf16.gmra.mrb[0].mxu0 %v493
        %v712 = vpop.f32.mrb[0].mxu0
        %v713 = vadd.f32 0.0, %v712
        %v714 = vpop.f32.mrb[0].mxu0
        %v715 = vpop.f32.mrb[0].mxu0
        %v716 = vadd.f32 0.0, %v715
        %v717 = vpop.f32.mrb[0].mxu0
        %718 = vdwg.mxu0
        %v719 = vadd.f32 %v334, %v593
        %v720 = vadd.f32 %v335, %v596
        %v721 = vadd.f32 %v336, %v601
        %v722 = vadd.f32 %v337, %v604
        %v723 = vadd.f32 %v338, %v609
        %v724 = vadd.f32 %v339, %v612
        %v725 = vadd.f32 %v340, %v617
        %v726 = vadd.f32 %v341, %v620
        %v727 = vadd.f32 %v342, %v625
        %v728 = vadd.f32 %v343, %v628
        %v729 = vadd.f32 %v344, %v633
        %v730 = vadd.f32 %v345, %v636
        %v731 = vadd.f32 %v346, %v641
        %v732 = vadd.f32 %v347, %v644
        %v733 = vadd.f32 %v348, %v649
        %v734 = vadd.f32 %v349, %v652
        %v735 = vadd.f32 %v350, %v657
        %v736 = vadd.f32 %v351, %v660
        %v737 = vadd.f32 %v352, %v665
        %v738 = vadd.f32 %v353, %v668
        %v739 = vadd.f32 %v354, %v673
        %v740 = vadd.f32 %v355, %v676
        %v741 = vadd.f32 %v356, %v681
        %v742 = vadd.f32 %v357, %v684
        %v743 = vadd.f32 %v358, %v689
        %v744 = vadd.f32 %v359, %v692
        %v745 = vadd.f32 %v360, %v697
        %v746 = vadd.f32 %v361, %v700
        %v747 = vadd.f32 %v362, %v705
        %v748 = vadd.f32 %v363, %v708
        %v749 = vadd.f32 %v364, %v713
        %v750 = vadd.f32 %v365, %v716
        %751 = vst [vmem:[#allocation2] sm:$0xff] %v719
        %752 = vst [vmem:[#allocation2 + $0x8] sm:$0xff] %v720
        %753 = vst [vmem:[#allocation2 + $0x10] sm:$0xff] %v721
        %754 = vst [vmem:[#allocation2 + $0x18] sm:$0xff] %v722
        %755 = vst [vmem:[#allocation2 + $0x20] sm:$0xff] %v723
        %756 = vst [vmem:[#allocation2 + $0x28] sm:$0xff] %v724
        %757 = vst [vmem:[#allocation2 + $0x30] sm:$0xff] %v725
        %758 = vst [vmem:[#allocation2 + $0x38] sm:$0xff] %v726
        %759 = vst [vmem:[#allocation2 + $0x40] sm:$0xff] %v727
        %760 = vst [vmem:[#allocation2 + $0x48] sm:$0xff] %v728
        %761 = vst [vmem:[#allocation2 + $0x50] sm:$0xff] %v729
        %762 = vst [vmem:[#allocation2 + $0x58] sm:$0xff] %v730
        %763 = vst [vmem:[#allocation2 + $0x60] sm:$0xff] %v731
        %764 = vst [vmem:[#allocation2 + $0x68] sm:$0xff] %v732
        %765 = vst [vmem:[#allocation2 + $0x70] sm:$0xff] %v733
        %766 = vst [vmem:[#allocation2 + $0x78] sm:$0xff] %v734
        %767 = vst [vmem:[#allocation2 + $0x80] sm:$0xff] %v735
        %768 = vst [vmem:[#allocation2 + $0x88] sm:$0xff] %v736
        %769 = vst [vmem:[#allocation2 + $0x90] sm:$0xff] %v737
        %770 = vst [vmem:[#allocation2 + $0x98] sm:$0xff] %v738
        %771 = vst [vmem:[#allocation2 + $0xa0] sm:$0xff] %v739
        %772 = vst [vmem:[#allocation2 + $0xa8] sm:$0xff] %v740
        %773 = vst [vmem:[#allocation2 + $0xb0] sm:$0xff] %v741
        %774 = vst [vmem:[#allocation2 + $0xb8] sm:$0xff] %v742
        %775 = vst [vmem:[#allocation2 + $0xc0] sm:$0xff] %v743
        %776 = vst [vmem:[#allocation2 + $0xc8] sm:$0xff] %v744
        %777 = vst [vmem:[#allocation2 + $0xd0] sm:$0xff] %v745
        %778 = vst [vmem:[#allocation2 + $0xd8] sm:$0xff] %v746
        %779 = vst [vmem:[#allocation2 + $0xe0] sm:$0xff] %v747
        %780 = vst [vmem:[#allocation2 + $0xe8] sm:$0xff] %v748
        %781 = vst [vmem:[#allocation2 + $0xf0] sm:$0xff] %v749
        %782 = vst [vmem:[#allocation2 + $0xf8] sm:$0xff] %v750
        // Predicated region
        $region49: #{tpu_custom_call.1} parent=35 // pred_check
          %p783 = pneg %p298
        $region50: #{tpu_custom_call.1} parent=35 // pred_check_branch
          %785 = sbr.rel (%p783) target = $region52
        $region51: #{tpu_custom_call.1} parent=35 // pred_region
          %v786 = vld [vmem:[#allocation2] sm:$0xff]
          %v787 = vld [vmem:[#allocation2 + $0x8] sm:$0xff]
          %v788 = vld [vmem:[#allocation2 + $0x10] sm:$0xff]
          %v789 = vld [vmem:[#allocation2 + $0x18] sm:$0xff]
          %v790 = vld [vmem:[#allocation2 + $0x20] sm:$0xff]
          %v791 = vld [vmem:[#allocation2 + $0x28] sm:$0xff]
          %v792 = vld [vmem:[#allocation2 + $0x30] sm:$0xff]
          %v793 = vld [vmem:[#allocation2 + $0x38] sm:$0xff]
          %v794 = vld [vmem:[#allocation2 + $0x40] sm:$0xff]
          %v795 = vld [vmem:[#allocation2 + $0x48] sm:$0xff]
          %v796 = vld [vmem:[#allocation2 + $0x50] sm:$0xff]
          %v797 = vld [vmem:[#allocation2 + $0x58] sm:$0xff]
          %v798 = vld [vmem:[#allocation2 + $0x60] sm:$0xff]
          %v799 = vld [vmem:[#allocation2 + $0x68] sm:$0xff]
          %v800 = vld [vmem:[#allocation2 + $0x70] sm:$0xff]
          %v801 = vld [vmem:[#allocation2 + $0x78] sm:$0xff]
          %v802 = vld [vmem:[#allocation2 + $0x80] sm:$0xff]
          %v803 = vld [vmem:[#allocation2 + $0x88] sm:$0xff]
          %v804 = vld [vmem:[#allocation2 + $0x90] sm:$0xff]
          %v805 = vld [vmem:[#allocation2 + $0x98] sm:$0xff]
          %v806 = vld [vmem:[#allocation2 + $0xa0] sm:$0xff]
          %v807 = vld [vmem:[#allocation2 + $0xa8] sm:$0xff]
          %v808 = vld [vmem:[#allocation2 + $0xb0] sm:$0xff]
          %v809 = vld [vmem:[#allocation2 + $0xb8] sm:$0xff]
          %v810 = vld [vmem:[#allocation2 + $0xc0] sm:$0xff]
          %v811 = vld [vmem:[#allocation2 + $0xc8] sm:$0xff]
          %v812 = vld [vmem:[#allocation2 + $0xd0] sm:$0xff]
          %v813 = vld [vmem:[#allocation2 + $0xd8] sm:$0xff]
          %v814 = vld [vmem:[#allocation2 + $0xe0] sm:$0xff]
          %v815 = vld [vmem:[#allocation2 + $0xe8] sm:$0xff]
          %v816 = vld [vmem:[#allocation2 + $0xf0] sm:$0xff]
          %v817 = vld [vmem:[#allocation2 + $0xf8] sm:$0xff]
          %v818 = vld [vmem:[%s292] sm:$0x1]
          %v820 = vlaneseq
          %v821 = vshrl.u32 %v820, 7
          %v822 = vsub.s32 0, %v821
          %v823 = vrot.slane %v818, %v822
          %v825 = vmul.f32 %v786, %v823
          %v826 = vmul.f32 %v787, %v823
          %v827 = vmul.f32 %v788, %v823
          %v828 = vmul.f32 %v789, %v823
          %v829 = vmul.f32 %v790, %v823
          %v830 = vmul.f32 %v791, %v823
          %v831 = vmul.f32 %v792, %v823
          %v832 = vmul.f32 %v793, %v823
          %v833 = vmul.f32 %v794, %v823
          %v834 = vmul.f32 %v795, %v823
          %v835 = vmul.f32 %v796, %v823
          %v836 = vmul.f32 %v797, %v823
          %v837 = vmul.f32 %v798, %v823
          %v838 = vmul.f32 %v799, %v823
          %v839 = vmul.f32 %v800, %v823
          %v840 = vmul.f32 %v801, %v823
          %v841 = vmul.f32 %v802, %v823
          %v842 = vmul.f32 %v803, %v823
          %v843 = vmul.f32 %v804, %v823
          %v844 = vmul.f32 %v805, %v823
          %v845 = vmul.f32 %v806, %v823
          %v846 = vmul.f32 %v807, %v823
          %v847 = vmul.f32 %v808, %v823
          %v848 = vmul.f32 %v809, %v823
          %v849 = vmul.f32 %v810, %v823
          %v850 = vmul.f32 %v811, %v823
          %v851 = vmul.f32 %v812, %v823
          %v852 = vmul.f32 %v813, %v823
          %v853 = vmul.f32 %v814, %v823
          %v854 = vmul.f32 %v815, %v823
          %v855 = vmul.f32 %v816, %v823
          %v856 = vmul.f32 %v817, %v823
          %v857 = vld [vmem:[%s295] sm:$0x1]
          %v859 = vlaneseq
          %v860 = vshrl.u32 %v859, 7
          %v861 = vsub.s32 0, %v860
          %v862 = vrot.slane %v857, %v861
          %v864 = vadd.f32 %v825, %v862
          %v865 = vadd.f32 %v826, %v862
          %v866 = vadd.f32 %v827, %v862
          %v867 = vadd.f32 %v828, %v862
          %v868 = vadd.f32 %v829, %v862
          %v869 = vadd.f32 %v830, %v862
          %v870 = vadd.f32 %v831, %v862
          %v871 = vadd.f32 %v832, %v862
          %v872 = vadd.f32 %v833, %v862
          %v873 = vadd.f32 %v834, %v862
          %v874 = vadd.f32 %v835, %v862
          %v875 = vadd.f32 %v836, %v862
          %v876 = vadd.f32 %v837, %v862
          %v877 = vadd.f32 %v838, %v862
          %v878 = vadd.f32 %v839, %v862
          %v879 = vadd.f32 %v840, %v862
          %v880 = vadd.f32 %v841, %v862
          %v881 = vadd.f32 %v842, %v862
          %v882 = vadd.f32 %v843, %v862
          %v883 = vadd.f32 %v844, %v862
          %v884 = vadd.f32 %v845, %v862
          %v885 = vadd.f32 %v846, %v862
          %v886 = vadd.f32 %v847, %v862
          %v887 = vadd.f32 %v848, %v862
          %v888 = vadd.f32 %v849, %v862
          %v889 = vadd.f32 %v850, %v862
          %v890 = vadd.f32 %v851, %v862
          %v891 = vadd.f32 %v852, %v862
          %v892 = vadd.f32 %v853, %v862
          %v893 = vadd.f32 %v854, %v862
          %v894 = vadd.f32 %v855, %v862
          %v895 = vadd.f32 %v856, %v862
          %v896 = vmax.f32 %v864, 0.0
          %v897 = vmax.f32 %v865, 0.0
          %v898 = vmax.f32 %v866, 0.0
          %v899 = vmax.f32 %v867, 0.0
          %v900 = vmax.f32 %v868, 0.0
          %v901 = vmax.f32 %v869, 0.0
          %v902 = vmax.f32 %v870, 0.0
          %v903 = vmax.f32 %v871, 0.0
          %v904 = vmax.f32 %v872, 0.0
          %v905 = vmax.f32 %v873, 0.0
          %v906 = vmax.f32 %v874, 0.0
          %v907 = vmax.f32 %v875, 0.0
          %v908 = vmax.f32 %v876, 0.0
          %v909 = vmax.f32 %v877, 0.0
          %v910 = vmax.f32 %v878, 0.0
          %v911 = vmax.f32 %v879, 0.0
          %v912 = vmax.f32 %v880, 0.0
          %v913 = vmax.f32 %v881, 0.0
          %v914 = vmax.f32 %v882, 0.0
          %v915 = vmax.f32 %v883, 0.0
          %v916 = vmax.f32 %v884, 0.0
          %v917 = vmax.f32 %v885, 0.0
          %v918 = vmax.f32 %v886, 0.0
          %v919 = vmax.f32 %v887, 0.0
          %v920 = vmax.f32 %v888, 0.0
          %v921 = vmax.f32 %v889, 0.0
          %v922 = vmax.f32 %v890, 0.0
          %v923 = vmax.f32 %v891, 0.0
          %v924 = vmax.f32 %v892, 0.0
          %v925 = vmax.f32 %v893, 0.0
          %v926 = vmax.f32 %v894, 0.0
          %v927 = vmax.f32 %v895, 0.0
          %v928 = vpack.c.bf16 %v897, %v896
          %v929 = vpack.c.bf16 %v899, %v898
          %v930 = vpack.c.bf16 %v901, %v900
          %v931 = vpack.c.bf16 %v903, %v902
          %v932 = vpack.c.bf16 %v905, %v904
          %v933 = vpack.c.bf16 %v907, %v906
          %v934 = vpack.c.bf16 %v909, %v908
          %v935 = vpack.c.bf16 %v911, %v910
          %v936 = vpack.c.bf16 %v913, %v912
          %v937 = vpack.c.bf16 %v915, %v914
          %v938 = vpack.c.bf16 %v917, %v916
          %v939 = vpack.c.bf16 %v919, %v918
          %v940 = vpack.c.bf16 %v921, %v920
          %v941 = vpack.c.bf16 %v923, %v922
          %v942 = vpack.c.bf16 %v925, %v924
          %v943 = vpack.c.bf16 %v927, %v926
          %v960 = vunpack.c.l.b16 %v928
          %v961 = vunpack.c.h.b16 %v928
          %v962 = vunpack.c.l.b16 %v929
          %v963 = vunpack.c.h.b16 %v929
          %v964 = vunpack.c.l.b16 %v930
          %v965 = vunpack.c.h.b16 %v930
          %v966 = vunpack.c.l.b16 %v931
          %v967 = vunpack.c.h.b16 %v931
          %v968 = vunpack.c.l.b16 %v932
          %v969 = vunpack.c.h.b16 %v932
          %v970 = vunpack.c.l.b16 %v933
          %v971 = vunpack.c.h.b16 %v933
          %v972 = vunpack.c.l.b16 %v934
          %v973 = vunpack.c.h.b16 %v934
          %v974 = vunpack.c.l.b16 %v935
          %v975 = vunpack.c.h.b16 %v935
          %v976 = vunpack.c.l.b16 %v936
          %v977 = vunpack.c.h.b16 %v936
          %v978 = vunpack.c.l.b16 %v937
          %v979 = vunpack.c.h.b16 %v937
          %v980 = vunpack.c.l.b16 %v938
          %v981 = vunpack.c.h.b16 %v938
          %v982 = vunpack.c.l.b16 %v939
          %v983 = vunpack.c.h.b16 %v939
          %v984 = vunpack.c.l.b16 %v940
          %v985 = vunpack.c.h.b16 %v940
          %v986 = vunpack.c.l.b16 %v941
          %v987 = vunpack.c.h.b16 %v941
          %v988 = vunpack.c.l.b16 %v942
          %v989 = vunpack.c.h.b16 %v942
          %v990 = vunpack.c.l.b16 %v943
          %v991 = vunpack.c.h.b16 %v943
          %v992 = vpack.c.b16 %v960, %v960
          %v993 = vpack.c.b16 %v961, %v961
          %v994 = vpack.c.b16 %v962, %v962
          %v995 = vpack.c.b16 %v963, %v963
          %v996 = vpack.c.b16 %v964, %v964
          %v997 = vpack.c.b16 %v965, %v965
          %v998 = vpack.c.b16 %v966, %v966
          %v999 = vpack.c.b16 %v967, %v967
          %v1000 = vpack.c.b16 %v968, %v968
          %v1001 = vpack.c.b16 %v969, %v969
          %v1002 = vpack.c.b16 %v970, %v970
          %v1003 = vpack.c.b16 %v971, %v971
          %v1004 = vpack.c.b16 %v972, %v972
          %v1005 = vpack.c.b16 %v973, %v973
          %v1006 = vpack.c.b16 %v974, %v974
          %v1007 = vpack.c.b16 %v975, %v975
          %v1008 = vpack.c.b16 %v976, %v976
          %v1009 = vpack.c.b16 %v977, %v977
          %v1010 = vpack.c.b16 %v978, %v978
          %v1011 = vpack.c.b16 %v979, %v979
          %v1012 = vpack.c.b16 %v980, %v980
          %v1013 = vpack.c.b16 %v981, %v981
          %v1014 = vpack.c.b16 %v982, %v982
          %v1015 = vpack.c.b16 %v983, %v983
          %v1016 = vpack.c.b16 %v984, %v984
          %v1017 = vpack.c.b16 %v985, %v985
          %v1018 = vpack.c.b16 %v986, %v986
          %v1019 = vpack.c.b16 %v987, %v987
          %v1020 = vpack.c.b16 %v988, %v988
          %v1021 = vpack.c.b16 %v989, %v989
          %v1022 = vpack.c.b16 %v990, %v990
          %v1023 = vpack.c.b16 %v991, %v991
          %1056 = vst [vmem:[%s287] sm:$0xf] %v992
          %1057 = vst [vmem:[%s287 + $0x4] sm:$0xf] %v993
          %1058 = vst [vmem:[%s287 + $0x8] sm:$0xf] %v994
          %1059 = vst [vmem:[%s287 + $0xc] sm:$0xf] %v995
          %1060 = vst [vmem:[%s287 + $0x10] sm:$0xf] %v996
          %1061 = vst [vmem:[%s287 + $0x14] sm:$0xf] %v997
          %1062 = vst [vmem:[%s287 + $0x18] sm:$0xf] %v998
          %1063 = vst [vmem:[%s287 + $0x1c] sm:$0xf] %v999
          %1064 = vst [vmem:[%s287 + $0x20] sm:$0xf] %v1000
          %1065 = vst [vmem:[%s287 + $0x24] sm:$0xf] %v1001
          %1066 = vst [vmem:[%s287 + $0x28] sm:$0xf] %v1002
          %1067 = vst [vmem:[%s287 + $0x2c] sm:$0xf] %v1003
          %1068 = vst [vmem:[%s287 + $0x30] sm:$0xf] %v1004
          %1069 = vst [vmem:[%s287 + $0x34] sm:$0xf] %v1005
          %1070 = vst [vmem:[%s287 + $0x38] sm:$0xf] %v1006
          %1071 = vst [vmem:[%s287 + $0x3c] sm:$0xf] %v1007
          %1072 = vst [vmem:[%s287 + $0x40] sm:$0xf] %v1008
          %1073 = vst [vmem:[%s287 + $0x44] sm:$0xf] %v1009
          %1074 = vst [vmem:[%s287 + $0x48] sm:$0xf] %v1010
          %1075 = vst [vmem:[%s287 + $0x4c] sm:$0xf] %v1011
          %1076 = vst [vmem:[%s287 + $0x50] sm:$0xf] %v1012
          %1077 = vst [vmem:[%s287 + $0x54] sm:$0xf] %v1013
          %1078 = vst [vmem:[%s287 + $0x58] sm:$0xf] %v1014
          %1079 = vst [vmem:[%s287 + $0x5c] sm:$0xf] %v1015
          %1080 = vst [vmem:[%s287 + $0x60] sm:$0xf] %v1016
          %1081 = vst [vmem:[%s287 + $0x64] sm:$0xf] %v1017
          %1082 = vst [vmem:[%s287 + $0x68] sm:$0xf] %v1018
          %1083 = vst [vmem:[%s287 + $0x6c] sm:$0xf] %v1019
          %1084 = vst [vmem:[%s287 + $0x70] sm:$0xf] %v1020
          %1085 = vst [vmem:[%s287 + $0x74] sm:$0xf] %v1021
          %1086 = vst [vmem:[%s287 + $0x78] sm:$0xf] %v1022
          %1087 = vst [vmem:[%s287 + $0x7c] sm:$0xf] %v1023
        $region52: #{tpu_custom_call.1} parent=35 // pred_fallthru
          _
        %s1088 = sand.u32 %s159, 1
        %s1089 = scalar_lea.sflag [#allocation5], %s1088
        %s1090 = sand.u32 %s159, 1
        %s1091 = smul.addr %s1090, 128
        %s1092 = scalar_lea.vmem [#allocation8], %s1091
        // Predicated region
        $region53: #{tpu_custom_call.1} parent=35 // pred_check
          %p1093 = pneg %p169
        $region54: #{tpu_custom_call.1} parent=35 // pred_check_branch
          %1095 = sbr.rel (%p1093) target = $region56
        $region55: #{tpu_custom_call.1} parent=35 // pred_region
          %s1096 = smul.u32 32, %s27
          %s1098 = ssub.s32 2048, 2048
          %1099 = vsyncadd %s1089, %s1098
          %s1100 = sadd.s32 %s28, %s1096
          %s1101 = smul.addr %s1100, 64
          %s1102 = scalar_lea.hbm %s4, %s1101
          %s1103 = sshll.u32 %s1092, 4
          %s1104 = int_to_ptr.vmem [resolvable:$true] %s1103
          %1109 = dma.vmem_to_hbm [thread:$0]  %s1104, 2048, %s1102, %s1089, 64, 64, 4
        $region56: #{tpu_custom_call.1} parent=35 // pred_fallthru
          _
      $region36: #{tpu_custom_call.1} parent=5 // pred_fallthru
        _
      %p1110 = scmp.le.s32.totalorder 2, %s17
      // Predicated region
      $region57: #{tpu_custom_call.1} parent=5 // pred_check
        %p1111 = pneg %p1110
      $region58: #{tpu_custom_call.1} parent=5 // pred_check_branch
        %1113 = sbr.rel (%p1111) target = $region60
      $region59: #{tpu_custom_call.1} parent=5 // pred_region
        %s1114 = ssub.s32 %s17, 2
        // Predicated region
        $region61: #{tpu_custom_call.1} parent=59 // pred_check
          %p1115 = pneg %p175
        $region62: #{tpu_custom_call.1} parent=59 // pred_check_branch
          %1117 = sbr.rel (%p1115) target = $region64
        $region63: #{tpu_custom_call.1} parent=59 // pred_region
          %s1118 = sand.u32 %s160, 1
          %s1119 = scalar_lea.sflag [#allocation5], %s1118
          %s1120 = sand.u32 %s160, 1
          %s1121 = smul.addr %s1120, 128
          %s1122 = scalar_lea.vmem [#allocation8], %s1121
          %1123 = dma.done %s1119, 2048
        $region64: #{tpu_custom_call.1} parent=59 // pred_fallthru
          _
      $region60: #{tpu_custom_call.1} parent=5 // pred_fallthru
        _
    $region6: #{tpu_custom_call.1} parent=1 // loop_footer
      %s21 = sadd.s32 1, %s17
    $region7: #{tpu_custom_call.1} parent=1 // loop_footer_branch
      %16 = sbr.rel target = $region3
    $region8: #{tpu_custom_call.1} parent=1 // loop_exit
      _
    %1124 = vsyncpa [#allocation4], 1
    %s1125 = scalar_lea.sflag [#allocation4], 1
    %1126 = vsyncpa %s1125, 1
    %1127 = vsyncpa [#allocation7], 1
    %1128 = vsyncpa [#allocation5], 1
    %s1129 = scalar_lea.sflag [#allocation5], 1
    %1130 = vsyncpa %s1129, 1

</llo_original>
